<compile_context>
chip_gen: v5e
topology: v5e:2x2
jax: 0.10.0
libtpu: 0.0.40
codegen_flags: <defaults>
</compile_context>

<pallas_src>
import functools

import jax
import jax.numpy as jnp
from jax.experimental import pallas as pl
from jax.experimental.pallas import tpu as pltpu

# Synthetic environment dimensions (CartPole-like):
N_STATES = 4      # env.observation_space.shape[0]
N_ACTIONS = 2     # env.action_space.n
HIDDEN = 10       # fc1 output size from the module definition

# Default lane tile for the batch grid (multiple of 128).  x tile footprint:
# 8 (padded sublanes) x 4096 x 4 B = 128 KiB, double-buffered -> tiny vs VMEM.
DEFAULT_BATCH_TILE = 4096


def net_kernel(xT_ref, w1_ref, b1_ref, w2_ref, b2_ref, oT_ref):
    # xT_ref: (N_STATES, Bt) with the batch on lanes.
    # w1_ref: (HIDDEN, N_STATES), w2_ref: (N_ACTIONS, HIDDEN)  (native PyTorch
    # (out_features, in_features) layout), biases as (out, 1) columns so they
    # broadcast over the lane/batch axis.
    h = jnp.dot(w1_ref[...], xT_ref[...], preferred_element_type=jnp.float32)
    h = jnp.maximum(h + b1_ref[...], 0.0)                    # ReLU on the VPU
    # Second projection stays on the MXU; at large batch it hides behind the
    # first dot, at tiny batch the whole call is launch-overhead bound anyway.
    oT_ref[...] = (
        jnp.dot(w2_ref[...], h.astype(w2_ref.dtype),
                preferred_element_type=jnp.float32)
        + b2_ref[...]
    ).astype(oT_ref.dtype)


def prepare_params(w1, b1, w2, b2, dtype=jnp.float32):
    """One-time layout of PyTorch-convention params into kernel-friendly form.

    w1: (HIDDEN, N_STATES), b1: (HIDDEN,), w2: (N_ACTIONS, HIDDEN),
    b2: (N_ACTIONS,).  Weights keep their native (out, in) layout; biases
    become (out, 1) columns.  Pass dtype=jnp.bfloat16 on v6e/v7x to halve
    HBM traffic for x/weights (accumulation stays f32 inside the kernel).
    """
    return (
        jnp.asarray(w1, dtype),
        jnp.asarray(b1, jnp.float32).reshape(HIDDEN, 1),
        jnp.asarray(w2, dtype),
        jnp.asarray(b2, jnp.float32).reshape(N_ACTIONS, 1),
    )


@functools.partial(jax.jit, static_argnames=("batch_tile",))
def net_forward_prepared(params, x, *, batch_tile=DEFAULT_BATCH_TILE):
    """x: (B, N_STATES).  params: output of prepare_params.  Returns (B, N_ACTIONS)."""
    w1, b1, w2, b2 = params
    B = x.shape[0]
    xT = jnp.asarray(x, w1.dtype).T                       # (N_STATES, B), batch on lanes

    if B > batch_tile:
        bt = batch_tile                                   # multiple of 128 -> lane-aligned
        b_pad = -(-B // bt) * bt
        if b_pad != B:
            xT = jnp.pad(xT, ((0, 0), (0, b_pad - B)))    # zero-pad tail tile
    else:
        bt, b_pad = B, B                                  # single block == full array dims

    outT = pl.pallas_call(
        net_kernel,
        out_shape=jax.ShapeDtypeStruct((N_ACTIONS, b_pad), jnp.float32),
        grid=(b_pad // bt,),
        in_specs=[
            pl.BlockSpec((N_STATES, bt), lambda i: (0, i)),
            pl.BlockSpec((HIDDEN, N_STATES), lambda i: (0, 0)),
            pl.BlockSpec((HIDDEN, 1), lambda i: (0, 0)),
            pl.BlockSpec((N_ACTIONS, HIDDEN), lambda i: (0, 0)),
            pl.BlockSpec((N_ACTIONS, 1), lambda i: (0, 0)),
        ],
        out_specs=pl.BlockSpec((N_ACTIONS, bt), lambda i: (0, i)),
        compiler_params=pltpu.CompilerParams(
            dimension_semantics=("parallel",),            # shard batch across v7x's 2 TCs
        ),
    )(xT, w1, b1, w2, b2)

    return outT[:, :B].T                                  # back to PyTorch (B, N_ACTIONS)


def net_forward(x, w1, b1, w2, b2):
    """Convenience wrapper matching the PyTorch parameter convention directly.
    Prefer prepare_params() + net_forward_prepared() in a hot loop."""
    return net_forward_prepared(prepare_params(w1, b1, w2, b2), x)


if __name__ == "__main__":
    key = jax.random.PRNGKey(0)
    kx, k1, kb1, k2, kb2 = jax.random.split(key, 5)

    # Parameters in PyTorch nn.Linear conventions; weights ~ N(0, 0.1).
    w1 = 0.1 * jax.random.normal(k1, (HIDDEN, N_STATES), dtype=jnp.float32)
    b1 = 0.01 * jax.random.normal(kb1, (HIDDEN,), dtype=jnp.float32)
    w2 = 0.1 * jax.random.normal(k2, (N_ACTIONS, HIDDEN), dtype=jnp.float32)
    b2 = 0.01 * jax.random.normal(kb2, (N_ACTIONS,), dtype=jnp.float32)

    # Hoisted, one-time parameter layout (kernel-friendly, no per-call .T/cast).
    params = prepare_params(w1, b1, w2, b2)

    def ref(xx):
        return jnp.maximum(xx @ w1.T + b1, 0.0) @ w2.T + b2

    # 1) Tiny action-selection batch (single full-array block, no grid padding).
    x_small = jax.random.normal(kx, (2, N_STATES), dtype=jnp.float32)
    out_small = jax.block_until_ready(net_forward_prepared(params, x_small))
    assert out_small.shape == (2, N_ACTIONS)
    assert jnp.allclose(out_small, ref(x_small), atol=1e-5, rtol=1e-5)

    # 2) Replay-sized batch exercising the batch grid + tail-padding path.
    x_big = jax.random.normal(kx, (300, N_STATES), dtype=jnp.float32)
    out_big = jax.block_until_ready(
        net_forward_prepared(params, x_big, batch_tile=128))
    assert out_big.shape == (300, N_ACTIONS)
    assert jnp.allclose(out_big, ref(x_big), atol=1e-5, rtol=1e-5)

    print("KERNEL_OK")
</pallas_src>

<mosaic_0001>
module attributes {stable_mosaic.version = 11 : i64} {
  func.func @net_kernel(%arg0: i32, %arg1: memref<4x2xf32, #tpu.memory_space<vmem>>, %arg2: memref<10x4xf32, #tpu.memory_space<vmem>>, %arg3: memref<10x1xf32, #tpu.memory_space<vmem>>, %arg4: memref<2x10xf32, #tpu.memory_space<vmem>>, %arg5: memref<2x1xf32, #tpu.memory_space<vmem>>, %arg6: memref<2x2xf32, #tpu.memory_space<vmem>>) attributes {dimension_semantics = [#tpu.dimension_semantics<parallel>], iteration_bounds = array<i64: 1>, scalar_prefetch = 0 : i64, scratch_operands = 0 : i64, tpu.core_type = #tpu.core_type<tc>, window_params = [{transform_indices = @transform_0, window_bounds = array<i64: 4, 2>}, {pipeline_mode = #tpu.pipeline_mode<synchronous>, transform_indices = @transform_1, window_bounds = array<i64: 10, 4>}, {pipeline_mode = #tpu.pipeline_mode<synchronous>, transform_indices = @transform_2, window_bounds = array<i64: 10, 1>}, {pipeline_mode = #tpu.pipeline_mode<synchronous>, transform_indices = @transform_3, window_bounds = array<i64: 2, 10>}, {pipeline_mode = #tpu.pipeline_mode<synchronous>, transform_indices = @transform_4, window_bounds = array<i64: 2, 1>}, {transform_indices = @transform_5, window_bounds = array<i64: 2, 2>}]} {
    %c0 = arith.constant 0 : index
    %c0_0 = arith.constant 0 : index
    %0 = vector.load %arg2[%c0, %c0_0] : memref<10x4xf32, #tpu.memory_space<vmem>>, vector<10x4xf32>
    %c0_1 = arith.constant 0 : index
    %c0_2 = arith.constant 0 : index
    %1 = vector.load %arg1[%c0_1, %c0_2] : memref<4x2xf32, #tpu.memory_space<vmem>>, vector<4x2xf32>
    %cst = arith.constant dense<0.000000e+00> : vector<10x2xf32>
    %2 = tpu.matmul %0, %1, %cst {dimension_numbers = #tpu.dot_dimension_numbers<[1], [0], [0], [1], [0, 0, 1, 1], [], []>} : vector<10x4xf32>, vector<4x2xf32>, vector<10x2xf32> -> vector<10x2xf32>
    %c0_3 = arith.constant 0 : index
    %c0_4 = arith.constant 0 : index
    %3 = vector.load %arg3[%c0_3, %c0_4] : memref<10x1xf32, #tpu.memory_space<vmem>>, vector<10x1xf32>
    %4 = vector.broadcast %3 : vector<10x1xf32> to vector<10x2xf32>
    %5 = arith.addf %2, %4 : vector<10x2xf32>
    %cst_5 = arith.constant 0.000000e+00 : f32
    %6 = vector.broadcast %cst_5 : f32 to vector<10x2xf32>
    %7 = arith.maximumf %5, %6 : vector<10x2xf32>
    %c0_6 = arith.constant 0 : index
    %c0_7 = arith.constant 0 : index
    %8 = vector.load %arg4[%c0_6, %c0_7] : memref<2x10xf32, #tpu.memory_space<vmem>>, vector<2x10xf32>
    %cst_8 = arith.constant dense<0.000000e+00> : vector<2x2xf32>
    %9 = tpu.matmul %8, %7, %cst_8 {dimension_numbers = #tpu.dot_dimension_numbers<[1], [0], [0], [1], [0, 0, 1, 1], [], []>} : vector<2x10xf32>, vector<10x2xf32>, vector<2x2xf32> -> vector<2x2xf32>
    %c0_9 = arith.constant 0 : index
    %c0_10 = arith.constant 0 : index
    %10 = vector.load %arg5[%c0_9, %c0_10] : memref<2x1xf32, #tpu.memory_space<vmem>>, vector<2x1xf32>
    %11 = vector.broadcast %10 : vector<2x1xf32> to vector<2x2xf32>
    %12 = arith.addf %9, %11 : vector<2x2xf32>
    %c0_11 = arith.constant 0 : index
    %c0_12 = arith.constant 0 : index
    %13 = vector.load %arg6[%c0_11, %c0_12] : memref<2x2xf32, #tpu.memory_space<vmem>>, vector<2x2xf32>
    tpu.vector_store %arg6[%c0_11, %c0_12], %12 {strides = array<i32>} : memref<2x2xf32, #tpu.memory_space<vmem>>, vector<2x2xf32>,
    return
  }
  func.func @transform_0(%arg0: i32) -> (i32, i32) {
    %c0_i32 = arith.constant 0 : i32
    %c0_i32_0 = arith.constant 0 : i32
    return %c0_i32, %arg0 : i32, i32
  }
  func.func @transform_1(%arg0: i32) -> (i32, i32) {
    %c0_i32 = arith.constant 0 : i32
    %c0_i32_0 = arith.constant 0 : i32
    %c0_i32_1 = arith.constant 0 : i32
    return %c0_i32, %c0_i32_0 : i32, i32
  }
  func.func @transform_2(%arg0: i32) -> (i32, i32) {
    %c0_i32 = arith.constant 0 : i32
    %c0_i32_0 = arith.constant 0 : i32
    %c0_i32_1 = arith.constant 0 : i32
    return %c0_i32, %c0_i32_0 : i32, i32
  }
  func.func @transform_3(%arg0: i32) -> (i32, i32) {
    %c0_i32 = arith.constant 0 : i32
    %c0_i32_0 = arith.constant 0 : i32
    %c0_i32_1 = arith.constant 0 : i32
    return %c0_i32, %c0_i32_0 : i32, i32
  }
  func.func @transform_4(%arg0: i32) -> (i32, i32) {
    %c0_i32 = arith.constant 0 : i32
    %c0_i32_0 = arith.constant 0 : i32
    %c0_i32_1 = arith.constant 0 : i32
    return %c0_i32, %c0_i32_0 : i32, i32
  }
  func.func @transform_5(%arg0: i32) -> (i32, i32) {
    %c0_i32 = arith.constant 0 : i32
    %c0_i32_0 = arith.constant 0 : i32
    return %c0_i32, %arg0 : i32, i32
  }
}

</mosaic_0001>

<llo_original>
// kernel: net_forward_prepared.1
$region0: #{net_forward_prepared.1}
  #allocation0 [shape = 'u32[]', space=smem, size = 0x4, offset = 0x4, fixed_abs, tag = 'smem constant byte address 0x4 - core index']
  #allocation1 [shape = 'u32[72,128]{1,0:T(1,128)}', space=vmem, size = 0x9000, scoped, tag = 'internal scratch']
  %s0 = inlined_call_operand.vmem [shape: f32[4,2], index: 0, kind: input, shape index: {}]
  %s1 = inlined_call_operand.vmem [shape: f32[10,4], index: 1, kind: input, shape index: {}]
  %s2 = inlined_call_operand.vmem [shape: f32[10,1], index: 2, kind: input, shape index: {}]
  %s3 = inlined_call_operand.vmem [shape: f32[2,10], index: 3, kind: input, shape index: {}]
  %s4 = inlined_call_operand.vmem [shape: f32[2,1], index: 4, kind: input, shape index: {}]
  %s5 = inlined_call_operand.vmem [shape: f32[2,2], index: 5, kind: output, shape index: {}]
  %s6 = sld [smem:[#allocation0]]
  $region30: #{net_forward_prepared.1} parent=0
    _
  %s8 = ssub.s32 1, %s6
  %s9 = scalar_select 0, %s8, %s6
  // Predicated region
  $region2: #{net_forward_prepared.1} parent=0 // pred_check
    _
  $region3: #{net_forward_prepared.1} parent=0 // pred_check_branch
    %11 = sbr.rel (0) target = $region5
  $region4: #{net_forward_prepared.1} parent=0 // pred_region
    _
  $region5: #{net_forward_prepared.1} parent=0 // pred_fallthru
    _
  // Predicated region
  $region6: #{net_forward_prepared.1} parent=0 // pred_check
    _
  $region7: #{net_forward_prepared.1} parent=0 // pred_check_branch
    %13 = sbr.rel (0) target = $region9
  $region8: #{net_forward_prepared.1} parent=0 // pred_region
    _
  $region9: #{net_forward_prepared.1} parent=0 // pred_fallthru
    _
  // Predicated region
  $region10: #{net_forward_prepared.1} parent=0 // pred_check
    _
  $region11: #{net_forward_prepared.1} parent=0 // pred_check_branch
    %15 = sbr.rel (0) target = $region13
  $region12: #{net_forward_prepared.1} parent=0 // pred_region
    _
  $region13: #{net_forward_prepared.1} parent=0 // pred_fallthru
    _
  // Predicated region
  $region14: #{net_forward_prepared.1} parent=0 // pred_check
    _
  $region15: #{net_forward_prepared.1} parent=0 // pred_check_branch
    %17 = sbr.rel (0) target = $region17
  $region16: #{net_forward_prepared.1} parent=0 // pred_region
    _
  $region17: #{net_forward_prepared.1} parent=0 // pred_fallthru
    _
  // Predicated region
  $region18: #{net_forward_prepared.1} parent=0 // pred_check
    _
  $region19: #{net_forward_prepared.1} parent=0 // pred_check_branch
    %19 = sbr.rel (0) target = $region21
  $region20: #{net_forward_prepared.1} parent=0 // pred_region
    _
  $region21: #{net_forward_prepared.1} parent=0 // pred_fallthru
    _
  %v20 = vld [vmem:[%s1] sm:$0xff]
  %v21 = vld [vmem:[%s1 + $0x8] sm:$0x3]
  %v22 = vld [vmem:[%s0] sm:$0xf]
  %v23 = vld [vmem:[%s2] sm:$0xff]
  %v24 = vld [vmem:[%s2 + $0x8] sm:$0x3]
  %26 = vset.pattern.permute.xlu0 0
  %27 = vperm.xlu0 %26, %v23
  %v28 = vpop.permute.xlu0 %27
  %31 = vset.pattern.permute.xlu0 0
  %32 = vperm.xlu0 %31, %v24
  %v33 = vpop.permute.xlu0 %32
  %vm35 = vcmask 31744
  %v37 = vsel %vm35, %v20, 0
  %v40 = vsel %vm35, %v21, 0
  %vm42 = vcmask 1043456
  %v44 = vsel %vm42, %v22, 0
  %46 = vmatpush.msra.mxu0 0.0
  %47 = vmatpush.msra.mxu0 0.0
  %48 = vmatpush.msra.mxu0 0.0
  %49 = vmatpush.msra.mxu0 0.0
  %50 = vmatpush.msra.mxu0 0.0
  %51 = vmatpush.msra.mxu0 0.0
  %52 = vmatpush.msra.mxu0 0.0
  %53 = vmatpush.msra.mxu0 0.0
  %54 = vmatpush.msra.mxu0 0.0
  %55 = vmatpush.msra.mxu0 0.0
  %56 = vmatpush.msra.mxu0 0.0
  %57 = vmatpush.msra.mxu0 0.0
  %58 = vmatpush.msra.mxu0 0.0
  %59 = vmatpush.msra.mxu0 0.0
  %60 = vmatpush.msra.mxu0 0.0
  %61 = vmatpush.msra.mxu0 %v44
  %62 = vmatmul.f32.gmra.mxu0 %v37
  %v63 = vpop.f32.mrf.mxu0
  %v64 = vadd.f32 %v28, %v63
  %65 = vmatmul.f32.gmra.mxu0 %v40
  %v66 = vpop.f32.mrf.mxu0
  %v67 = vadd.f32 %v33, %v66
  %68 = vdwg.mxu0
  %v69 = vmax.f32 %v64, 0.0
  %v70 = vmax.f32 %v67, 0.0
  %v71 = vld [vmem:[%s3] sm:$0x3]
  %v72 = vld [vmem:[%s4] sm:$0x3]
  %74 = vset.pattern.permute.xlu0 0
  %75 = vperm.xlu0 %74, %v72
  %v76 = vpop.permute.xlu0 %75
  %vm78 = vcmask 80896
  %v80 = vsel %vm78, %v71, 0
  %vm82 = vcmask 1041408
  %v84 = vsel %vm82, %v70, 0
  %86 = vmatpush.msra.mxu0 0.0
  %87 = vmatpush.msra.mxu0 0.0
  %88 = vmatpush.msra.mxu0 0.0
  %89 = vmatpush.msra.mxu0 0.0
  %90 = vmatpush.msra.mxu0 0.0
  %91 = vmatpush.msra.mxu0 0.0
  %92 = vmatpush.msra.mxu0 0.0
  %93 = vmatpush.msra.mxu0 0.0
  %94 = vmatpush.msra.mxu0 0.0
  %95 = vmatpush.msra.mxu0 0.0
  %96 = vmatpush.msra.mxu0 0.0
  %97 = vmatpush.msra.mxu0 0.0
  %98 = vmatpush.msra.mxu0 0.0
  %99 = vmatpush.msra.mxu0 0.0
  %100 = vmatpush.msra.mxu0 %v84
  %101 = vmatpush.msra.mxu0 %v69
  %102 = vmatmul.f32.gmra.mxu0 %v80
  %v103 = vpop.f32.mrf.mxu0
  %v104 = vadd.f32 %v76, %v103
  %105 = vdwg.mxu0
  %vm106 = vcmask 9216
  %107 = vst.msk [vmem:[%s5] sm:$0x3] %vm106, %v104
  // Predicated region
  $region22: #{net_forward_prepared.1} parent=0 // pred_check
    _
  $region23: #{net_forward_prepared.1} parent=0 // pred_check_branch
    %109 = sbr.rel (0) target = $region25
  $region24: #{net_forward_prepared.1} parent=0 // pred_region
    _
  $region25: #{net_forward_prepared.1} parent=0 // pred_fallthru
    _
  // Predicated region
  $region26: #{net_forward_prepared.1} parent=0 // pred_check
    _
  $region27: #{net_forward_prepared.1} parent=0 // pred_check_branch
    %111 = sbr.rel (0) target = $region29
  $region28: #{net_forward_prepared.1} parent=0 // pred_region
    _
  $region29: #{net_forward_prepared.1} parent=0 // pred_fallthru
    _

</llo_original>
